<compile_context>
chip_gen: v7x
topology: tpu7x:2x2x1
jax: 0.10.0
libtpu: 0.0.40
codegen_flags: <defaults>
</compile_context>

<pallas_src>
import functools
import math

import jax
import jax.numpy as jnp
from jax.experimental import pallas as pl
from jax.experimental.pallas import tpu as pltpu


def _round_up(x, m):
    return (x + m - 1) // m * m


def _gcn_kernel_bias(x_ref, adj_ref, w_ref, b_ref, o_ref, acc_ref):
    # x_ref:   (bk, Fin_p)      adj_ref: (bm, bk)
    # w_ref:   (Fin_p, Fout_p)  b_ref:   (1, Fout_p) f32
    # o_ref:   (bm, Fout_p)     acc_ref: (bm, Fout_p) f32 scratch
    k = pl.program_id(2)

    @pl.when(k == 0)
    def _():
        acc_ref[...] = jnp.zeros_like(acc_ref)

    # support slab for this k tile: (bk, Fout_p), MXU matmul, f32 accumulate.
    support = jnp.dot(x_ref[...], w_ref[...],
                      preferred_element_type=jnp.float32)
    # adj tile @ support slab, accumulated in f32.
    acc_ref[...] += jnp.dot(adj_ref[...], support.astype(adj_ref.dtype),
                            preferred_element_type=jnp.float32)

    @pl.when(k == pl.num_programs(2) - 1)
    def _():
        o_ref[...] = (acc_ref[...] + b_ref[...]).astype(o_ref.dtype)


def _gcn_kernel_nobias(x_ref, adj_ref, w_ref, o_ref, acc_ref):
    k = pl.program_id(2)

    @pl.when(k == 0)
    def _():
        acc_ref[...] = jnp.zeros_like(acc_ref)

    support = jnp.dot(x_ref[...], w_ref[...],
                      preferred_element_type=jnp.float32)
    acc_ref[...] += jnp.dot(adj_ref[...], support.astype(adj_ref.dtype),
                            preferred_element_type=jnp.float32)

    @pl.when(k == pl.num_programs(2) - 1)
    def _():
        o_ref[...] = acc_ref[...].astype(o_ref.dtype)


@functools.partial(jax.jit,
                   static_argnames=("compute_dtype", "block_m", "block_k"))
def graph_convolution(x, adj, weight, bias=None, *,
                      compute_dtype=jnp.bfloat16,
                      block_m=256, block_k=512):
    """GCN forward.  x: [B,N,Fin], adj: [B,N,N], weight: [Fin,Fout], bias: [Fout]|None."""
    B, N, Fin = x.shape
    Fin_w, Fout = weight.shape
    assert Fin_w == Fin, "weight in_features must match input features"
    out_dtype = x.dtype

    # ---- padded / tiled geometry -------------------------------------------
    fin_p = _round_up(Fin, 8)       # sublane-aligned contraction dim
    fout_p = _round_up(Fout, 128)   # lane-dense output -> unmasked stores
    bm = min(block_m, _round_up(N, 128))   # output row tile
    bk = min(block_k, _round_up(N, 128))   # reduction (adj column) tile
    nm_p = _round_up(N, bm)
    nk_p = _round_up(N, bk)
    n_row_tiles = nm_p // bm
    n_k_tiles = nk_p // bk

    # ---- zero-padded, compute-dtype operands -------------------------------
    x_p = jnp.zeros((B, nk_p, fin_p), compute_dtype)
    x_p = x_p.at[:, :N, :Fin].set(x.astype(compute_dtype))
    adj_p = jnp.zeros((B, nm_p, nk_p), compute_dtype)
    adj_p = adj_p.at[:, :N, :N].set(adj.astype(compute_dtype))
    w_p = jnp.zeros((fin_p, fout_p), compute_dtype)
    w_p = w_p.at[:Fin, :Fout].set(weight.astype(compute_dtype))

    in_specs = [
        pl.BlockSpec((None, bk, fin_p), lambda b, i, k: (b, k, 0)),   # x k-slab
        pl.BlockSpec((None, bm, bk), lambda b, i, k: (b, i, k)),      # adj tile
        pl.BlockSpec((fin_p, fout_p), lambda b, i, k: (0, 0)),        # weight (resident)
    ]
    args = [x_p, adj_p, w_p]

    if bias is not None:
        b_p = jnp.zeros((1, fout_p), jnp.float32)
        b_p = b_p.at[0, :Fout].set(bias.astype(jnp.float32))
        in_specs.append(pl.BlockSpec((1, fout_p), lambda b, i, k: (0, 0)))
        args.append(b_p)
        kernel = _gcn_kernel_bias
    else:
        kernel = _gcn_kernel_nobias

    # ---- cost estimate + explicit VMEM budget ------------------------------
    cs = jnp.dtype(compute_dtype).itemsize
    osz = jnp.dtype(out_dtype).itemsize
    flops = (2 * B * nm_p * nk_p * fout_p                       # adj @ support
             + 2 * B * n_row_tiles * nk_p * fin_p * fout_p)     # support per row tile
    bytes_accessed = (B * nm_p * nk_p * cs                      # adj stream (dominant)
                      + B * n_row_tiles * nk_p * fin_p * cs     # x re-streamed per row tile
                      + B * nm_p * fout_p * osz                 # output
                      + fin_p * fout_p * cs + fout_p * 4)       # weight + bias
    cost = pl.CostEstimate(flops=int(flops), transcendentals=0,
                           bytes_accessed=int(bytes_accessed))

    tile_bytes = (2 * (bm * bk * cs            # adj tile, double-buffered
                       + bk * fin_p * cs       # x slab
                       + bm * fout_p * osz     # output tile
                       + fin_p * fout_p * cs   # weight
                       + fout_p * 4)           # bias
                  + bm * fout_p * 4)           # f32 accumulator scratch
    # Generous headroom, capped well below v7x's 64 MiB physical VMEM.
    vmem_limit = int(min(48 * 1024 * 1024, max(16 * 1024 * 1024, 2 * tile_bytes)))

    out_p = pl.pallas_call(
        kernel,
        out_shape=jax.ShapeDtypeStruct((B, nm_p, fout_p), out_dtype),
        grid_spec=pltpu.PrefetchScalarGridSpec(
            num_scalar_prefetch=0,
            grid=(B, n_row_tiles, n_k_tiles),
            in_specs=in_specs,
            out_specs=pl.BlockSpec((None, bm, fout_p), lambda b, i, k: (b, i, 0)),
            scratch_shapes=[pltpu.VMEM((bm, fout_p), jnp.float32)],
        ),
        compiler_params=pltpu.CompilerParams(
            dimension_semantics=("parallel", "parallel", "arbitrary"),
            vmem_limit_bytes=vmem_limit,
        ),
        cost_estimate=cost,
    )(*args)

    return out_p[:, :N, :Fout]


if __name__ == "__main__":
    # Small deterministic example consistent with the module's forward:
    # batch=2, nodes=16, in_features=8, out_features=32
    B, N, Fin, Fout = 2, 16, 8, 32

    key = jax.random.PRNGKey(0)
    k_x, k_adj, k_w, k_b = jax.random.split(key, 4)

    x = jax.random.normal(k_x, (B, N, Fin), dtype=jnp.float32)
    adj = jax.random.uniform(k_adj, (B, N, N), dtype=jnp.float32)

    # reset_parameters(): uniform(-stdv, stdv) with stdv = 1/sqrt(out_features)
    stdv = 1.0 / math.sqrt(Fout)
    weight = jax.random.uniform(k_w, (Fin, Fout), dtype=jnp.float32,
                                minval=-stdv, maxval=stdv)
    bias = jax.random.uniform(k_b, (Fout,), dtype=jnp.float32,
                              minval=-stdv, maxval=stdv)

    # Plain-JAX references.
    support_ref = jnp.matmul(x, weight)
    ref = jnp.einsum('bij,bjd->bid', adj, support_ref) + bias
    ref_nb = jnp.einsum('bij,bjd->bid', adj, support_ref)

    # 1) exact-precision path (f32 operands) -- tight tolerance.
    out_f32 = jax.block_until_ready(
        graph_convolution(x, adj, weight, bias, compute_dtype=jnp.float32))
    assert out_f32.shape == (B, N, Fout)
    assert jnp.allclose(out_f32, ref, atol=1e-5, rtol=1e-5)

    # 2) performance path (bf16 operands on the MXU, f32 accumulation).
    out_bf16 = jax.block_until_ready(graph_convolution(x, adj, weight, bias))
    assert out_bf16.shape == (B, N, Fout)
    assert jnp.allclose(out_bf16, ref, atol=5e-2, rtol=5e-2)

    # 3) bias=None variant (separate kernel, no zero-bias stream).
    out_nb = jax.block_until_ready(
        graph_convolution(x, adj, weight, None, compute_dtype=jnp.float32))
    assert jnp.allclose(out_nb, ref_nb, atol=1e-5, rtol=1e-5)

    print("KERNEL_OK")
</pallas_src>

<mosaic_0001>
module attributes {stable_mosaic.version = 11 : i64} {
  func.func @_gcn_kernel_bias(%arg0: i32, %arg1: i32, %arg2: i32, %arg3: memref<1x128x8xf32, #tpu.memory_space<vmem>>, %arg4: memref<1x128x128xf32, #tpu.memory_space<vmem>>, %arg5: memref<8x128xf32, #tpu.memory_space<vmem>>, %arg6: memref<1x128xf32, #tpu.memory_space<vmem>>, %arg7: memref<1x128x128xf32, #tpu.memory_space<vmem>>, %arg8: memref<128x128xf32, #tpu.memory_space<vmem>>) attributes {dimension_semantics = [#tpu.dimension_semantics<parallel>, #tpu.dimension_semantics<parallel>, #tpu.dimension_semantics<arbitrary>], iteration_bounds = array<i64: 2, 1, 1>, scalar_prefetch = 0 : i64, scratch_operands = 1 : i64, tpu.core_type = #tpu.core_type<tc>, window_params = [{transform_indices = @transform_0, window_bounds = array<i64: 1, 128, 8>}, {transform_indices = @transform_1, window_bounds = array<i64: 1, 128, 128>}, {pipeline_mode = #tpu.pipeline_mode<synchronous>, transform_indices = @transform_2, window_bounds = array<i64: 8, 128>}, {pipeline_mode = #tpu.pipeline_mode<synchronous>, transform_indices = @transform_3, window_bounds = array<i64: 1, 128>}, {transform_indices = @transform_4, window_bounds = array<i64: 1, 128, 128>}]} {
    %c0_i32 = arith.constant 0 : i32
    %0 = arith.cmpi eq, %arg2, %c0_i32 : i32
    %1 = arith.extui %0 : i1 to i32
    %c0_i32_0 = arith.constant 0 : i32
    %2 = arith.cmpi ne, %1, %c0_i32_0 : i32
    scf.if %2 {
      %cst_15 = arith.constant 0.000000e+00 : f32
      %16 = vector.broadcast %cst_15 : f32 to vector<128x128xf32>
      %c0_16 = arith.constant 0 : index
      %c0_17 = arith.constant 0 : index
      %17 = vector.load %arg8[%c0_16, %c0_17] : memref<128x128xf32, #tpu.memory_space<vmem>>, vector<128x128xf32>
      tpu.vector_store %arg8[%c0_16, %c0_17], %16 {strides = array<i32>} : memref<128x128xf32, #tpu.memory_space<vmem>>, vector<128x128xf32>,
    } else {
    }
    %c0 = arith.constant 0 : index
    %c0_1 = arith.constant 0 : index
    %c0_2 = arith.constant 0 : index
    %3 = vector.load %arg3[%c0, %c0_1, %c0_2] : memref<1x128x8xf32, #tpu.memory_space<vmem>>, vector<1x128x8xf32>
    %4 = vector.shape_cast %3 : vector<1x128x8xf32> to vector<128x8xf32>
    %c0_3 = arith.constant 0 : index
    %c0_4 = arith.constant 0 : index
    %5 = vector.load %arg5[%c0_3, %c0_4] : memref<8x128xf32, #tpu.memory_space<vmem>>, vector<8x128xf32>
    %cst = arith.constant dense<0.000000e+00> : vector<128x128xf32>
    %6 = tpu.matmul %4, %5, %cst {dimension_numbers = #tpu.dot_dimension_numbers<[1], [0], [0], [1], [0, 0, 1, 1], [], []>} : vector<128x8xf32>, vector<8x128xf32>, vector<128x128xf32> -> vector<128x128xf32>
    %c0_5 = arith.constant 0 : index
    %c0_6 = arith.constant 0 : index
    %7 = vector.load %arg8[%c0_5, %c0_6] : memref<128x128xf32, #tpu.memory_space<vmem>>, vector<128x128xf32>
    %c0_7 = arith.constant 0 : index
    %c0_8 = arith.constant 0 : index
    %c0_9 = arith.constant 0 : index
    %8 = vector.load %arg4[%c0_7, %c0_8, %c0_9] : memref<1x128x128xf32, #tpu.memory_space<vmem>>, vector<1x128x128xf32>
    %9 = vector.shape_cast %8 : vector<1x128x128xf32> to vector<128x128xf32>
    %cst_10 = arith.constant dense<0.000000e+00> : vector<128x128xf32>
    %10 = tpu.matmul %9, %6, %cst_10 {dimension_numbers = #tpu.dot_dimension_numbers<[1], [0], [0], [1], [0, 0, 1, 1], [], []>} : vector<128x128xf32>, vector<128x128xf32>, vector<128x128xf32> -> vector<128x128xf32>
    %11 = arith.addf %7, %10 : vector<128x128xf32>
    %c0_11 = arith.constant 0 : index
    %c0_12 = arith.constant 0 : index
    %12 = vector.load %arg8[%c0_11, %c0_12] : memref<128x128xf32, #tpu.memory_space<vmem>>, vector<128x128xf32>
    tpu.vector_store %arg8[%c0_11, %c0_12], %11 {strides = array<i32>} : memref<128x128xf32, #tpu.memory_space<vmem>>, vector<128x128xf32>,
    %c0_i32_13 = arith.constant 0 : i32
    %13 = arith.cmpi eq, %arg2, %c0_i32_13 : i32
    %14 = arith.extui %13 : i1 to i32
    %c0_i32_14 = arith.constant 0 : i32
    %15 = arith.cmpi ne, %14, %c0_i32_14 : i32
    scf.if %15 {
      %c0_15 = arith.constant 0 : index
      %c0_16 = arith.constant 0 : index
      %16 = vector.load %arg8[%c0_15, %c0_16] : memref<128x128xf32, #tpu.memory_space<vmem>>, vector<128x128xf32>
      %c0_17 = arith.constant 0 : index
      %c0_18 = arith.constant 0 : index
      %17 = vector.load %arg6[%c0_17, %c0_18] : memref<1x128xf32, #tpu.memory_space<vmem>>, vector<1x128xf32>
      %18 = vector.broadcast %17 : vector<1x128xf32> to vector<128x128xf32>
      %19 = arith.addf %16, %18 : vector<128x128xf32>
      %c0_19 = arith.constant 0 : index
      %c0_20 = arith.constant 0 : index
      %c0_21 = arith.constant 0 : index
      %20 = vector.load %arg7[%c0_19, %c0_20, %c0_21] : memref<1x128x128xf32, #tpu.memory_space<vmem>>, vector<1x128x128xf32>
      %21 = vector.shape_cast %20 : vector<1x128x128xf32> to vector<128x128xf32>
      %22 = vector.shape_cast %19 : vector<128x128xf32> to vector<1x128x128xf32>
      tpu.vector_store %arg7[%c0_19, %c0_20, %c0_21], %22 {strides = array<i32>} : memref<1x128x128xf32, #tpu.memory_space<vmem>>, vector<1x128x128xf32>,
    } else {
    }
    return
  }
  func.func @transform_0(%arg0: i32, %arg1: i32, %arg2: i32) -> (i32, i32, i32) {
    %c0_i32 = arith.constant 0 : i32
    %c0_i32_0 = arith.constant 0 : i32
    return %arg0, %arg2, %c0_i32 : i32, i32, i32
  }
  func.func @transform_1(%arg0: i32, %arg1: i32, %arg2: i32) -> (i32, i32, i32) {
    %c0_i32 = arith.constant 0 : i32
    return %arg0, %arg1, %arg2 : i32, i32, i32
  }
  func.func @transform_2(%arg0: i32, %arg1: i32, %arg2: i32) -> (i32, i32) {
    %c0_i32 = arith.constant 0 : i32
    %c0_i32_0 = arith.constant 0 : i32
    %c0_i32_1 = arith.constant 0 : i32
    return %c0_i32, %c0_i32_0 : i32, i32
  }
  func.func @transform_3(%arg0: i32, %arg1: i32, %arg2: i32) -> (i32, i32) {
    %c0_i32 = arith.constant 0 : i32
    %c0_i32_0 = arith.constant 0 : i32
    %c0_i32_1 = arith.constant 0 : i32
    return %c0_i32, %c0_i32_0 : i32, i32
  }
  func.func @transform_4(%arg0: i32, %arg1: i32, %arg2: i32) -> (i32, i32, i32) {
    %c0_i32 = arith.constant 0 : i32
    %c0_i32_0 = arith.constant 0 : i32
    return %arg0, %arg1, %c0_i32 : i32, i32, i32
  }
}

</mosaic_0001>

<llo_original>
// kernel: graph_convolution.1
$region0: #{graph_convolution.1}
  #allocation0 [shape = 'u32[]', space=smem, size = 0x4, offset = 0x4, fixed_abs, tag = 'smem constant byte address 0x4 - core index']
  #allocation1 [shape = 'u32[144,128]{1,0:T(1,128)}', space=vmem, size = 0x12000, scoped, tag = 'internal scratch']
  #allocation2 [shape = 'f32[128,128]{1,0:T(8,128)}', space=vmem, size = 0x10000, scoped, tag = 'scratch operand']
  %s0 = inlined_call_operand.vmem [shape: f32[2,128,8], index: 0, kind: input, shape index: {}]
  %s1 = inlined_call_operand.vmem [shape: f32[2,128,128], index: 1, kind: input, shape index: {}]
  %s2 = inlined_call_operand.vmem [shape: f32[8,128], index: 2, kind: input, shape index: {}]
  %s3 = inlined_call_operand.vmem [shape: f32[1,128], index: 3, kind: input, shape index: {}]
  %s4 = inlined_call_operand.vmem [shape: f32[2,128,128], index: 4, kind: output, shape index: {}]
  %s5 = sld [smem:[#allocation0]]
  $region57: #{graph_convolution.1} parent=0
    _
  %s7 = ssub.s32 1, %s5
  %s8 = scalar_select 0, %s7, %s5
  loop: start=0, step=1, limit=4
  $region2: #{graph_convolution.1} parent=0 // loop_pre_header
    _
  $region3: #{graph_convolution.1} parent=0 // loop_header
    %s10 = sphi 0, %s14
    %p11 = scmp.ge.s32.totalorder %s10, 4
    %s17 = sphi 0, %s36
    %s18 = sphi 0, %s32
    %s19 = sphi 0, %s28
    %s20 = sphi 0, %s17
    %s21 = sphi 0, %s18
    %s22 = sphi 0, %s19
    %s23 = sphi 0, %s20
    %s24 = sphi 0, %s21
    %s25 = sphi 0, %s22
    %s41 = sphi 0, %s43
    %s44 = sphi 0, %s41
    %s45 = sphi 0, %s44
    %s61 = sphi 0, %s45
    %s71 = sphi 0, %s73
    %s74 = sphi 0, %s71
    %s75 = sphi 0, %s74
    %s91 = sphi 0, %s75
    %s95 = sphi 0, %s95
    %s97 = sphi 0, %s95
    %s98 = sphi 0, %s97
    %s112 = sphi 0, %s98
    %s116 = sphi 0, %s116
    %s118 = sphi 0, %s116
    %s119 = sphi 0, %s118
    %s133 = sphi 0, %s119
    %s141 = sphi 0, %s143
    %s144 = sphi 0, %s141
    %s145 = sphi 0, %s144
    %s161 = sphi 0, %s145
  $region4: #{graph_convolution.1} parent=0 // loop_header_branch
    %13 = sbr.rel (%p11) target = $region8
  $region5: #{graph_convolution.1} parent=0 // loop_body
    %s15 = ssub.s32 %s10, 1
    %s16 = ssub.s32 %s10, 2
    %s26 = sadd.s32 1, %s19
    %p27 = scmp.ge.s32.totalorder %s26, 1
    %s28 = scalar_select %p27, 0, %s26
    %s29 = sadd.s32 1, %s18
    %s30 = scalar_select %p27, %s29, %s18
    %p31 = scmp.ge.s32.totalorder %s30, 1
    %s32 = scalar_select %p31, 0, %s30
    %s33 = sadd.s32 1, %s17
    %s34 = scalar_select %p31, %s33, %s17
    %p35 = scmp.ge.s32.totalorder %s34, 2
    %s36 = scalar_select %p35, 0, %s34
    %s37 = ssub.s32 %s17, %s36
    %s38 = ssub.s32 %s19, %s28
    %s39 = sor.u32 %s37, %s38
    %p40 = scmp.eq.s32.totalorder %s39, 0
    %s42 = sadd.s32 %s41, 1
    %s43 = scalar_select %p40, %s41, %s42
    %p46 = pneg %p40
    %p47 = scmp.eq.s32.totalorder %s10, 1
    %p48 = por %p46, %p47
    %p49 = scmp.ne.s32.totalorder %s41, %s44
    %p50 = scmp.eq.s32.totalorder %s10, 0
    %p51 = por %p49, %p50
    %p52 = scmp.ne.s32.totalorder %s41, %s44
    %p53 = scmp.eq.s32.totalorder %s15, 1
    %p54 = por %p52, %p53
    %p55 = scmp.ne.s32.totalorder %s44, %s45
    %p56 = scmp.eq.s32.totalorder %s15, 0
    %p57 = por %p55, %p56
    %p58 = scmp.ne.s32.totalorder %s44, %s45
    %p59 = scmp.eq.s32.totalorder %s16, 1
    %p60 = por %p58, %p59
    %p62 = scmp.ne.s32.totalorder %s45, %s61
    %p63 = scmp.eq.s32.totalorder %s16, 0
    %p64 = por %p62, %p63
    %s65 = ssub.s32 %s17, %s36
    %s66 = ssub.s32 %s18, %s32
    %s67 = sor.u32 %s65, %s66
    %s68 = ssub.s32 %s19, %s28
    %s69 = sor.u32 %s67, %s68
    %p70 = scmp.eq.s32.totalorder %s69, 0
    %s72 = sadd.s32 %s71, 1
    %s73 = scalar_select %p70, %s71, %s72
    %p76 = pneg %p70
    %p77 = scmp.eq.s32.totalorder %s10, 1
    %p78 = por %p76, %p77
    %p79 = scmp.ne.s32.totalorder %s71, %s74
    %p80 = scmp.eq.s32.totalorder %s10, 0
    %p81 = por %p79, %p80
    %p82 = scmp.ne.s32.totalorder %s71, %s74
    %p83 = scmp.eq.s32.totalorder %s15, 1
    %p84 = por %p82, %p83
    %p85 = scmp.ne.s32.totalorder %s74, %s75
    %p86 = scmp.eq.s32.totalorder %s15, 0
    %p87 = por %p85, %p86
    %p88 = scmp.ne.s32.totalorder %s74, %s75
    %p89 = scmp.eq.s32.totalorder %s16, 1
    %p90 = por %p88, %p89
    %p92 = scmp.ne.s32.totalorder %s75, %s91
    %p93 = scmp.eq.s32.totalorder %s16, 0
    %p94 = por %p92, %p93
    %s96 = sadd.s32 %s95, 1
    %p99 = scmp.eq.s32.totalorder %s10, 1
    %p100 = scmp.ne.s32.totalorder %s95, %s97
    %p101 = scmp.eq.s32.totalorder %s10, 0
    %p102 = por %p100, %p101
    %p103 = scmp.ne.s32.totalorder %s95, %s97
    %p104 = scmp.eq.s32.totalorder %s15, 1
    %p105 = por %p103, %p104
    %p106 = scmp.ne.s32.totalorder %s97, %s98
    %p107 = scmp.eq.s32.totalorder %s15, 0
    %p108 = por %p106, %p107
    %p109 = scmp.ne.s32.totalorder %s97, %s98
    %p110 = scmp.eq.s32.totalorder %s16, 1
    %p111 = por %p109, %p110
    %p113 = scmp.ne.s32.totalorder %s98, %s112
    %p114 = scmp.eq.s32.totalorder %s16, 0
    %p115 = por %p113, %p114
    %s117 = sadd.s32 %s116, 1
    %p120 = scmp.eq.s32.totalorder %s10, 1
    %p121 = scmp.ne.s32.totalorder %s116, %s118
    %p122 = scmp.eq.s32.totalorder %s10, 0
    %p123 = por %p121, %p122
    %p124 = scmp.ne.s32.totalorder %s116, %s118
    %p125 = scmp.eq.s32.totalorder %s15, 1
    %p126 = por %p124, %p125
    %p127 = scmp.ne.s32.totalorder %s118, %s119
    %p128 = scmp.eq.s32.totalorder %s15, 0
    %p129 = por %p127, %p128
    %p130 = scmp.ne.s32.totalorder %s118, %s119
    %p131 = scmp.eq.s32.totalorder %s16, 1
    %p132 = por %p130, %p131
    %p134 = scmp.ne.s32.totalorder %s119, %s133
    %p135 = scmp.eq.s32.totalorder %s16, 0
    %p136 = por %p134, %p135
    %s137 = ssub.s32 %s17, %s36
    %s138 = ssub.s32 %s18, %s32
    %s139 = sor.u32 %s137, %s138
    %p140 = scmp.eq.s32.totalorder %s139, 0
    %s142 = sadd.s32 %s141, 1
    %s143 = scalar_select %p140, %s141, %s142
    %p146 = pneg %p140
    %p147 = scmp.eq.s32.totalorder %s10, 1
    %p148 = por %p146, %p147
    %p149 = scmp.ne.s32.totalorder %s141, %s144
    %p150 = scmp.eq.s32.totalorder %s10, 0
    %p151 = por %p149, %p150
    %p152 = scmp.ne.s32.totalorder %s141, %s144
    %p153 = scmp.eq.s32.totalorder %s15, 1
    %p154 = por %p152, %p153
    %p155 = scmp.ne.s32.totalorder %s144, %s145
    %p156 = scmp.eq.s32.totalorder %s15, 0
    %p157 = por %p155, %p156
    %p158 = scmp.ne.s32.totalorder %s144, %s145
    %p159 = scmp.eq.s32.totalorder %s16, 1
    %p160 = por %p158, %p159
    %p162 = scmp.ne.s32.totalorder %s145, %s161
    %p163 = scmp.eq.s32.totalorder %s16, 0
    %p164 = por %p162, %p163
    %p165 = scmp.le.s32.totalorder 1, %s10
    %p166 = scmp.lt.s32.totalorder %s10, 3
    %p167 = pnand %p165, %p166
    %p168 = pneg %p167
    // Predicated region
    $region9: #{graph_convolution.1} parent=5 // pred_check
      _
    $region10: #{graph_convolution.1} parent=5 // pred_check_branch
      %170 = sbr.rel (%p167) target = $region12
    $region11: #{graph_convolution.1} parent=5 // pred_region
      %s171 = ssub.s32 %s10, 1
      // Predicated region
      $region13: #{graph_convolution.1} parent=11 // pred_check
        %p172 = pneg %p108
      $region14: #{graph_convolution.1} parent=11 // pred_check_branch
        %174 = sbr.rel (%p172) target = $region16
      $region15: #{graph_convolution.1} parent=11 // pred_region
        _
      $region16: #{graph_convolution.1} parent=11 // pred_fallthru
        _
      // Predicated region
      $region17: #{graph_convolution.1} parent=11 // pred_check
        %p175 = pneg %p129
      $region18: #{graph_convolution.1} parent=11 // pred_check_branch
        %177 = sbr.rel (%p175) target = $region20
      $region19: #{graph_convolution.1} parent=11 // pred_region
        _
      $region20: #{graph_convolution.1} parent=11 // pred_fallthru
        _
    $region12: #{graph_convolution.1} parent=5 // pred_fallthru
      _
    %p178 = scmp.lt.s32.totalorder %s10, 2
    // Predicated region
    $region21: #{graph_convolution.1} parent=5 // pred_check
      %p179 = pneg %p178
    $region22: #{graph_convolution.1} parent=5 // pred_check_branch
      %181 = sbr.rel (%p179) target = $region24
    $region23: #{graph_convolution.1} parent=5 // pred_region
      // Predicated region
      $region25: #{graph_convolution.1} parent=23 // pred_check
        %p182 = pneg %p51
      $region26: #{graph_convolution.1} parent=23 // pred_check_branch
        %184 = sbr.rel (%p182) target = $region28
      $region27: #{graph_convolution.1} parent=23 // pred_region
        %s185 = smul.u32 16, %s19
        %p186 = scmp.lt.s32.totalorder %s17, 1
        %s187 = scalar_select %p186, %s17, 1
        %p188 = scmp.lt.s32.totalorder %s185, 15
        %s189 = scalar_select %p188, %s185, 15
        %s190 = smul.addr %s187, 16
        %s191 = sadd.s32 %s189, %s190
        %s192 = smul.addr %s191, 8
        %s193 = scalar_lea.vmem %s0, %s192
        %s194 = smul.u32 16, %s19
      $region28: #{graph_convolution.1} parent=23 // pred_fallthru
        _
      // Predicated region
      $region29: #{graph_convolution.1} parent=23 // pred_check
        %p195 = pneg %p81
      $region30: #{graph_convolution.1} parent=23 // pred_check_branch
        %197 = sbr.rel (%p195) target = $region32
      $region31: #{graph_convolution.1} parent=23 // pred_region
        %s198 = smul.u32 16, %s18
        %p199 = scmp.lt.s32.totalorder %s17, 1
        %s200 = scalar_select %p199, %s17, 1
        %p201 = scmp.lt.s32.totalorder %s198, 15
        %s202 = scalar_select %p201, %s198, 15
        %p203 = scmp.lt.s32.totalorder %s19, 0
        %s204 = scalar_select %p203, %s19, 0
        %s205 = sadd.s32 %s204, %s202
        %s206 = smul.addr %s200, 16
        %s207 = sadd.s32 %s205, %s206
        %s208 = smul.addr %s207, 8
        %s209 = scalar_lea.vmem %s1, %s208
        %s210 = smul.u32 16, %s18
      $region32: #{graph_convolution.1} parent=23 // pred_fallthru
        _
    $region24: #{graph_convolution.1} parent=5 // pred_fallthru
      _
    %p211 = scmp.le.s32.totalorder 1, %s10
    %p212 = scmp.lt.s32.totalorder %s10, 3
    %p213 = pnand %p211, %p212
    %p214 = pneg %p213
    // Predicated region
    $region33: #{graph_convolution.1} parent=5 // pred_check
      _
    $region34: #{graph_convolution.1} parent=5 // pred_check_branch
      %216 = sbr.rel (%p213) target = $region36
    $region35: #{graph_convolution.1} parent=5 // pred_region
      %s217 = ssub.s32 %s10, 1
      %s218 = smul.u32 16, %s22
      %p219 = scmp.lt.s32.totalorder %s20, 1
      %s220 = scalar_select %p219, %s20, 1
      %p221 = scmp.lt.s32.totalorder %s218, 15
      %s222 = scalar_select %p221, %s218, 15
      %s223 = smul.addr %s220, 16
      %s224 = sadd.s32 %s222, %s223
      %s225 = smul.addr %s224, 8
      %s226 = scalar_lea.vmem %s0, %s225
      %p227 = pneg %p57
      %p228 = pneg %p54
      %s229 = smul.u32 16, %s21
      %p230 = scmp.lt.s32.totalorder %s20, 1
      %s231 = scalar_select %p230, %s20, 1
      %p232 = scmp.lt.s32.totalorder %s229, 15
      %s233 = scalar_select %p232, %s229, 15
      %p234 = scmp.lt.s32.totalorder %s22, 0
      %s235 = scalar_select %p234, %s22, 0
      %s236 = sadd.s32 %s235, %s233
      %s237 = smul.addr %s231, 16
      %s238 = sadd.s32 %s236, %s237
      %s239 = smul.addr %s238, 8
      %s240 = scalar_lea.vmem %s1, %s239
      %p241 = pneg %p87
      %p242 = pneg %p84
      %p243 = pneg %p108
      %p244 = pneg %p105
      %p245 = pneg %p129
      %p246 = pneg %p126
      %p247 = pneg %p157
      %p248 = pneg %p154
      %s249 = smul.u32 16, %s21
      %p250 = scmp.lt.s32.totalorder %s20, 1
      %s251 = scalar_select %p250, %s20, 1
      %p252 = scmp.lt.s32.totalorder %s249, 15
      %s253 = scalar_select %p252, %s249, 15
      %s254 = smul.addr %s251, 16
      %s255 = sadd.s32 %s253, %s254
      %s256 = smul.addr %s255, 8
      %s257 = scalar_lea.vmem %s4, %s256
      %s258 = smul.u32 16, %s22
      %p259 = scmp.lt.s32.totalorder %s20, 1
      %s260 = scalar_select %p259, %s20, 1
      %p261 = scmp.lt.s32.totalorder %s258, 15
      %s262 = scalar_select %p261, %s258, 15
      %s263 = smul.addr %s260, 16
      %s264 = sadd.s32 %s262, %s263
      %s265 = smul.addr %s264, 8
      %s266 = scalar_lea.vmem %s0, %s265
      %s267 = smul.u32 16, %s22
      %s268 = smul.u32 16, %s21
      %p269 = scmp.lt.s32.totalorder %s20, 1
      %s270 = scalar_select %p269, %s20, 1
      %p271 = scmp.lt.s32.totalorder %s268, 15
      %s272 = scalar_select %p271, %s268, 15
      %p273 = scmp.lt.s32.totalorder %s22, 0
      %s274 = scalar_select %p273, %s22, 0
      %s275 = sadd.s32 %s274, %s272
      %s276 = smul.addr %s270, 16
      %s277 = sadd.s32 %s275, %s276
      %s278 = smul.addr %s277, 8
      %s279 = scalar_lea.vmem %s1, %s278
      %s280 = smul.u32 16, %s21
      %s281 = smul.u32 16, %s21
      %p282 = scmp.lt.s32.totalorder %s20, 1
      %s283 = scalar_select %p282, %s20, 1
      %p284 = scmp.lt.s32.totalorder %s281, 15
      %s285 = scalar_select %p284, %s281, 15
      %s286 = smul.addr %s283, 16
      %s287 = sadd.s32 %s285, %s286
      %s288 = smul.addr %s287, 8
      %s289 = scalar_lea.vmem %s4, %s288
      %s290 = smul.u32 16, %s21
      %p291 = scmp.eq.s32.totalorder %s22, 0
      // Predicated region
      $region37: #{graph_convolution.1} parent=35 // pred_check
        %p292 = pneg %p291
      $region38: #{graph_convolution.1} parent=35 // pred_check_branch
        %294 = sbr.rel (%p292) target = $region40
      $region39: #{graph_convolution.1} parent=35 // pred_region
        %295 = vst [vmem:[#allocation2] sm:$0xff] 0.0
        %296 = vst [vmem:[#allocation2 + $0x8] sm:$0xff] 0.0
        %297 = vst [vmem:[#allocation2 + $0x10] sm:$0xff] 0.0
        %298 = vst [vmem:[#allocation2 + $0x18] sm:$0xff] 0.0
        %299 = vst [vmem:[#allocation2 + $0x20] sm:$0xff] 0.0
        %300 = vst [vmem:[#allocation2 + $0x28] sm:$0xff] 0.0
        %301 = vst [vmem:[#allocation2 + $0x30] sm:$0xff] 0.0
        %302 = vst [vmem:[#allocation2 + $0x38] sm:$0xff] 0.0
        %303 = vst [vmem:[#allocation2 + $0x40] sm:$0xff] 0.0
        %304 = vst [vmem:[#allocation2 + $0x48] sm:$0xff] 0.0
        %305 = vst [vmem:[#allocation2 + $0x50] sm:$0xff] 0.0
        %306 = vst [vmem:[#allocation2 + $0x58] sm:$0xff] 0.0
        %307 = vst [vmem:[#allocation2 + $0x60] sm:$0xff] 0.0
        %308 = vst [vmem:[#allocation2 + $0x68] sm:$0xff] 0.0
        %309 = vst [vmem:[#allocation2 + $0x70] sm:$0xff] 0.0
        %310 = vst [vmem:[#allocation2 + $0x78] sm:$0xff] 0.0
      $region40: #{graph_convolution.1} parent=35 // pred_fallthru
        _
      %v311 = vld [vmem:[%s266] sm:$0xff]
      %v312 = vld [vmem:[%s266 + $0x8] sm:$0xff]
      %v313 = vld [vmem:[%s266 + $0x10] sm:$0xff]
      %v314 = vld [vmem:[%s266 + $0x18] sm:$0xff]
      %v315 = vld [vmem:[%s266 + $0x20] sm:$0xff]
      %v316 = vld [vmem:[%s266 + $0x28] sm:$0xff]
      %v317 = vld [vmem:[%s266 + $0x30] sm:$0xff]
      %v318 = vld [vmem:[%s266 + $0x38] sm:$0xff]
      %v319 = vld [vmem:[%s266 + $0x40] sm:$0xff]
      %v320 = vld [vmem:[%s266 + $0x48] sm:$0xff]
      %v321 = vld [vmem:[%s266 + $0x50] sm:$0xff]
      %v322 = vld [vmem:[%s266 + $0x58] sm:$0xff]
      %v323 = vld [vmem:[%s266 + $0x60] sm:$0xff]
      %v324 = vld [vmem:[%s266 + $0x68] sm:$0xff]
      %v325 = vld [vmem:[%s266 + $0x70] sm:$0xff]
      %v326 = vld [vmem:[%s266 + $0x78] sm:$0xff]
      %v327 = vld [vmem:[%s2] sm:$0xff]
      %vm328 = vcmask 64512
      %v330 = vsel %vm328, %v311, 0
      %v333 = vsel %vm328, %v312, 0
      %v336 = vsel %vm328, %v313, 0
      %v339 = vsel %vm328, %v314, 0
      %v342 = vsel %vm328, %v315, 0
      %v345 = vsel %vm328, %v316, 0
      %v348 = vsel %vm328, %v317, 0
      %v351 = vsel %vm328, %v318, 0
      %v354 = vsel %vm328, %v319, 0
      %v357 = vsel %vm328, %v320, 0
      %v360 = vsel %vm328, %v321, 0
      %v363 = vsel %vm328, %v322, 0
      %v366 = vsel %vm328, %v323, 0
      %v369 = vsel %vm328, %v324, 0
      %v372 = vsel %vm328, %v325, 0
      %v375 = vsel %vm328, %v326, 0
      %377 = vmatprep.subr.mxu0 0.0
      %378 = vmatpush1.msra.mxu0 %v327
      %379 = vmatprep.subr.mxu0 0.0
      %380 = vmatpush1.msra.mxu0 0.0
      %381 = vmatprep.subr.mxu0 0.0
      %382 = vmatpush1.msra.mxu0 0.0
      %383 = vmatprep.subr.mxu0 0.0
      %384 = vmatpush1.msra.mxu0 0.0
      %385 = vmatprep.subr.mxu0 0.0
      %386 = vmatpush1.msra.mxu0 0.0
      %387 = vmatprep.subr.mxu0 0.0
      %388 = vmatpush1.msra.mxu0 0.0
      %389 = vmatprep.subr.mxu0 0.0
      %390 = vmatpush1.msra.mxu0 0.0
      %391 = vmatprep.subr.mxu0 0.0
      %392 = vmatpush1.msra.mxu0 0.0
      %393 = vmatprep.subr.mxu0 0.0
      %394 = vmatpush1.msra.mxu0 0.0
      %395 = vmatprep.subr.mxu0 0.0
      %396 = vmatpush1.msra.mxu0 0.0
      %397 = vmatprep.subr.mxu0 0.0
      %398 = vmatpush1.msra.mxu0 0.0
      %399 = vmatprep.subr.mxu0 0.0
      %400 = vmatpush1.msra.mxu0 0.0
      %401 = vmatprep.subr.mxu0 0.0
      %402 = vmatpush1.msra.mxu0 0.0
      %403 = vmatprep.subr.mxu0 0.0
      %404 = vmatpush1.msra.mxu0 0.0
      %405 = vmatprep.subr.mxu0 0.0
      %406 = vmatpush1.msra.mxu0 0.0
      %407 = vmatprep.subr.mxu0 0.0
      %408 = vmatpush1.msra.mxu0 0.0
      %409 = vmatprep.subr.mxu0 0.0
      %410 = vmatpush1.msra.mxu0 0.0
      %411 = vmatprep.subr.mxu0 0.0
      %412 = vmatpush1.msra.mxu0 0.0
      %413 = vmatprep.subr.mxu0 0.0
      %414 = vmatpush1.msra.mxu0 0.0
      %415 = vmatprep.subr.mxu0 0.0
      %416 = vmatpush1.msra.mxu0 0.0
      %417 = vmatprep.subr.mxu0 0.0
      %418 = vmatpush1.msra.mxu0 0.0
      %419 = vmatprep.subr.mxu0 0.0
      %420 = vmatpush1.msra.mxu0 0.0
      %421 = vmatprep.subr.mxu0 0.0
      %422 = vmatpush1.msra.mxu0 0.0
      %423 = vmatprep.subr.mxu0 0.0
      %424 = vmatpush1.msra.mxu0 0.0
      %425 = vmatprep.subr.mxu0 0.0
      %426 = vmatpush1.msra.mxu0 0.0
      %427 = vmatprep.subr.mxu0 0.0
      %428 = vmatpush1.msra.mxu0 0.0
      %429 = vmatprep.subr.mxu0 0.0
      %430 = vmatpush1.msra.mxu0 0.0
      %431 = vmatprep.subr.mxu0 0.0
      %432 = vmatpush1.msra.mxu0 0.0
      %433 = vmatprep.subr.mxu0 0.0
      %434 = vmatpush1.msra.mxu0 0.0
      %435 = vmatprep.subr.mxu0 0.0
      %436 = vmatpush1.msra.mxu0 0.0
      %437 = vmatprep.subr.mxu0 0.0
      %438 = vmatpush1.msra.mxu0 0.0
      %439 = vmatprep.subr.mxu0 0.0
      %440 = vmatpush1.msra.mxu0 0.0
      %441 = vmatprep.mubr.f32.mxu0 0.0
      %442 = vmatmul.mubr.f32.gmra.mrb[0].mxu0 %v330
      %v443 = vpop.f32.mrb[0].mxu0
      %v444 = vadd.f32 0.0, %v443
      %v445 = vpop.f32.mrb[0].mxu0
      %446 = vmatprep.mubr.f32.mxu0 0.0
      %447 = vmatmul.mubr.f32.gmra.mrb[0].mxu0 %v333
      %v448 = vpop.f32.mrb[0].mxu0
      %v449 = vadd.f32 0.0, %v448
      %v450 = vpop.f32.mrb[0].mxu0
      %451 = vmatprep.mubr.f32.mxu0 0.0
      %452 = vmatmul.mubr.f32.gmra.mrb[0].mxu0 %v336
      %v453 = vpop.f32.mrb[0].mxu0
      %v454 = vadd.f32 0.0, %v453
      %v455 = vpop.f32.mrb[0].mxu0
      %456 = vmatprep.mubr.f32.mxu0 0.0
      %457 = vmatmul.mubr.f32.gmra.mrb[0].mxu0 %v339
      %v458 = vpop.f32.mrb[0].mxu0
      %v459 = vadd.f32 0.0, %v458
      %v460 = vpop.f32.mrb[0].mxu0
      %461 = vmatprep.mubr.f32.mxu0 0.0
      %462 = vmatmul.mubr.f32.gmra.mrb[0].mxu0 %v342
      %v463 = vpop.f32.mrb[0].mxu0
      %v464 = vadd.f32 0.0, %v463
      %v465 = vpop.f32.mrb[0].mxu0
      %466 = vmatprep.mubr.f32.mxu0 0.0
      %467 = vmatmul.mubr.f32.gmra.mrb[0].mxu0 %v345
      %v468 = vpop.f32.mrb[0].mxu0
      %v469 = vadd.f32 0.0, %v468
      %v470 = vpop.f32.mrb[0].mxu0
      %471 = vmatprep.mubr.f32.mxu0 0.0
      %472 = vmatmul.mubr.f32.gmra.mrb[0].mxu0 %v348
      %v473 = vpop.f32.mrb[0].mxu0
      %v474 = vadd.f32 0.0, %v473
      %v475 = vpop.f32.mrb[0].mxu0
      %476 = vmatprep.mubr.f32.mxu0 0.0
      %477 = vmatmul.mubr.f32.gmra.mrb[0].mxu0 %v351
      %v478 = vpop.f32.mrb[0].mxu0
      %v479 = vadd.f32 0.0, %v478
      %v480 = vpop.f32.mrb[0].mxu0
      %481 = vmatprep.mubr.f32.mxu0 0.0
      %482 = vmatmul.mubr.f32.gmra.mrb[0].mxu0 %v354
      %v483 = vpop.f32.mrb[0].mxu0
      %v484 = vadd.f32 0.0, %v483
      %v485 = vpop.f32.mrb[0].mxu0
      %486 = vmatprep.mubr.f32.mxu0 0.0
      %487 = vmatmul.mubr.f32.gmra.mrb[0].mxu0 %v357
      %v488 = vpop.f32.mrb[0].mxu0
      %v489 = vadd.f32 0.0, %v488
      %v490 = vpop.f32.mrb[0].mxu0
      %491 = vmatprep.mubr.f32.mxu0 0.0
      %492 = vmatmul.mubr.f32.gmra.mrb[0].mxu0 %v360
      %v493 = vpop.f32.mrb[0].mxu0
      %v494 = vadd.f32 0.0, %v493
      %v495 = vpop.f32.mrb[0].mxu0
      %496 = vmatprep.mubr.f32.mxu0 0.0
      %497 = vmatmul.mubr.f32.gmra.mrb[0].mxu0 %v363
      %v498 = vpop.f32.mrb[0].mxu0
      %v499 = vadd.f32 0.0, %v498
      %v500 = vpop.f32.mrb[0].mxu0
      %501 = vmatprep.mubr.f32.mxu0 0.0
      %502 = vmatmul.mubr.f32.gmra.mrb[0].mxu0 %v366
      %v503 = vpop.f32.mrb[0].mxu0
      %v504 = vadd.f32 0.0, %v503
      %v505 = vpop.f32.mrb[0].mxu0
      %506 = vmatprep.mubr.f32.mxu0 0.0
      %507 = vmatmul.mubr.f32.gmra.mrb[0].mxu0 %v369
      %v508 = vpop.f32.mrb[0].mxu0
      %v509 = vadd.f32 0.0, %v508
      %v510 = vpop.f32.mrb[0].mxu0
      %511 = vmatprep.mubr.f32.mxu0 0.0
      %512 = vmatmul.mubr.f32.gmra.mrb[0].mxu0 %v372
      %v513 = vpop.f32.mrb[0].mxu0
      %v514 = vadd.f32 0.0, %v513
      %v515 = vpop.f32.mrb[0].mxu0
      %516 = vmatprep.mubr.f32.mxu0 0.0
      %517 = vmatmul.mubr.f32.gmra.mrb[0].mxu0 %v375
      %v518 = vpop.f32.mrb[0].mxu0
      %v519 = vadd.f32 0.0, %v518
      %v520 = vpop.f32.mrb[0].mxu0
      %521 = vdwg.mxu0
      %v522 = vld [vmem:[#allocation2] sm:$0xff]
      %v523 = vld [vmem:[#allocation2 + $0x8] sm:$0xff]
      %v524 = vld [vmem:[#allocation2 + $0x10] sm:$0xff]
      %v525 = vld [vmem:[#allocation2 + $0x18] sm:$0xff]
      %v526 = vld [vmem:[#allocation2 + $0x20] sm:$0xff]
      %v527 = vld [vmem:[#allocation2 + $0x28] sm:$0xff]
      %v528 = vld [vmem:[#allocation2 + $0x30] sm:$0xff]
      %v529 = vld [vmem:[#allocation2 + $0x38] sm:$0xff]
      %v530 = vld [vmem:[#allocation2 + $0x40] sm:$0xff]
      %v531 = vld [vmem:[#allocation2 + $0x48] sm:$0xff]
      %v532 = vld [vmem:[#allocation2 + $0x50] sm:$0xff]
      %v533 = vld [vmem:[#allocation2 + $0x58] sm:$0xff]
      %v534 = vld [vmem:[#allocation2 + $0x60] sm:$0xff]
      %v535 = vld [vmem:[#allocation2 + $0x68] sm:$0xff]
      %v536 = vld [vmem:[#allocation2 + $0x70] sm:$0xff]
      %v537 = vld [vmem:[#allocation2 + $0x78] sm:$0xff]
      %v538 = vld [vmem:[%s279] sm:$0xff]
      %v539 = vld [vmem:[%s279 + $0x8] sm:$0xff]
      %v540 = vld [vmem:[%s279 + $0x10] sm:$0xff]
      %v541 = vld [vmem:[%s279 + $0x18] sm:$0xff]
      %v542 = vld [vmem:[%s279 + $0x20] sm:$0xff]
      %v543 = vld [vmem:[%s279 + $0x28] sm:$0xff]
      %v544 = vld [vmem:[%s279 + $0x30] sm:$0xff]
      %v545 = vld [vmem:[%s279 + $0x38] sm:$0xff]
      %v546 = vld [vmem:[%s279 + $0x40] sm:$0xff]
      %v547 = vld [vmem:[%s279 + $0x48] sm:$0xff]
      %v548 = vld [vmem:[%s279 + $0x50] sm:$0xff]
      %v549 = vld [vmem:[%s279 + $0x58] sm:$0xff]
      %v550 = vld [vmem:[%s279 + $0x60] sm:$0xff]
      %v551 = vld [vmem:[%s279 + $0x68] sm:$0xff]
      %v552 = vld [vmem:[%s279 + $0x70] sm:$0xff]
      %v553 = vld [vmem:[%s279 + $0x78] sm:$0xff]
      %554 = vmatprep.subr.mxu0 0.0
      %555 = vmatpush1.msra.mxu0 %v444
      %556 = vmatprep.subr.mxu0 0.0
      %557 = vmatpush1.msra.mxu0 %v449
      %558 = vmatprep.subr.mxu0 0.0
      %559 = vmatpush1.msra.mxu0 %v454
      %560 = vmatprep.subr.mxu0 0.0
      %561 = vmatpush1.msra.mxu0 %v459
      %562 = vmatprep.subr.mxu0 0.0
      %563 = vmatpush1.msra.mxu0 %v464
      %564 = vmatprep.subr.mxu0 0.0
      %565 = vmatpush1.msra.mxu0 %v469
      %566 = vmatprep.subr.mxu0 0.0
      %567 = vmatpush1.msra.mxu0 %v474
      %568 = vmatprep.subr.mxu0 0.0
      %569 = vmatpush1.msra.mxu0 %v479
      %570 = vmatprep.subr.mxu0 0.0
      %571 = vmatpush1.msra.mxu0 %v484
      %572 = vmatprep.subr.mxu0 0.0
      %573 = vmatpush1.msra.mxu0 %v489
      %574 = vmatprep.subr.mxu0 0.0
      %575 = vmatpush1.msra.mxu0 %v494
      %576 = vmatprep.subr.mxu0 0.0
      %577 = vmatpush1.msra.mxu0 %v499
      %578 = vmatprep.subr.mxu0 0.0
      %579 = vmatpush1.msra.mxu0 %v504
      %580 = vmatprep.subr.mxu0 0.0
      %581 = vmatpush1.msra.mxu0 %v509
      %582 = vmatprep.subr.mxu0 0.0
      %583 = vmatpush1.msra.mxu0 %v514
      %584 = vmatprep.subr.mxu0 0.0
      %585 = vmatpush1.msra.mxu0 %v519
      %586 = vmatprep.subr.mxu0 0.0
      %587 = vmatpush1.msra.mxu0 0.0
      %588 = vmatprep.subr.mxu0 0.0
      %589 = vmatpush1.msra.mxu0 0.0
      %590 = vmatprep.subr.mxu0 0.0
      %591 = vmatpush1.msra.mxu0 0.0
      %592 = vmatprep.subr.mxu0 0.0
      %593 = vmatpush1.msra.mxu0 0.0
      %594 = vmatprep.subr.mxu0 0.0
      %595 = vmatpush1.msra.mxu0 0.0
      %596 = vmatprep.subr.mxu0 0.0
      %597 = vmatpush1.msra.mxu0 0.0
      %598 = vmatprep.subr.mxu0 0.0
      %599 = vmatpush1.msra.mxu0 0.0
      %600 = vmatprep.subr.mxu0 0.0
      %601 = vmatpush1.msra.mxu0 0.0
      %602 = vmatprep.subr.mxu0 0.0
      %603 = vmatpush1.msra.mxu0 0.0
      %604 = vmatprep.subr.mxu0 0.0
      %605 = vmatpush1.msra.mxu0 0.0
      %606 = vmatprep.subr.mxu0 0.0
      %607 = vmatpush1.msra.mxu0 0.0
      %608 = vmatprep.subr.mxu0 0.0
      %609 = vmatpush1.msra.mxu0 0.0
      %610 = vmatprep.subr.mxu0 0.0
      %611 = vmatpush1.msra.mxu0 0.0
      %612 = vmatprep.subr.mxu0 0.0
      %613 = vmatpush1.msra.mxu0 0.0
      %614 = vmatprep.subr.mxu0 0.0
      %615 = vmatpush1.msra.mxu0 0.0
      %616 = vmatprep.subr.mxu0 0.0
      %617 = vmatpush1.msra.mxu0 0.0
      %618 = vmatprep.mubr.f32.mxu0 0.0
      %619 = vmatmul.mubr.f32.gmra.mrb[0].mxu0 %v538
      %v620 = vpop.f32.mrb[0].mxu0
      %v621 = vadd.f32 0.0, %v620
      %v622 = vpop.f32.mrb[0].mxu0
      %623 = vmatprep.mubr.f32.mxu0 0.0
      %624 = vmatmul.mubr.f32.gmra.mrb[0].mxu0 %v539
      %v625 = vpop.f32.mrb[0].mxu0
      %v626 = vadd.f32 0.0, %v625
      %v627 = vpop.f32.mrb[0].mxu0
      %628 = vmatprep.mubr.f32.mxu0 0.0
      %629 = vmatmul.mubr.f32.gmra.mrb[0].mxu0 %v540
      %v630 = vpop.f32.mrb[0].mxu0
      %v631 = vadd.f32 0.0, %v630
      %v632 = vpop.f32.mrb[0].mxu0
      %633 = vmatprep.mubr.f32.mxu0 0.0
      %634 = vmatmul.mubr.f32.gmra.mrb[0].mxu0 %v541
      %v635 = vpop.f32.mrb[0].mxu0
      %v636 = vadd.f32 0.0, %v635
      %v637 = vpop.f32.mrb[0].mxu0
      %638 = vmatprep.mubr.f32.mxu0 0.0
      %639 = vmatmul.mubr.f32.gmra.mrb[0].mxu0 %v542
      %v640 = vpop.f32.mrb[0].mxu0
      %v641 = vadd.f32 0.0, %v640
      %v642 = vpop.f32.mrb[0].mxu0
      %643 = vmatprep.mubr.f32.mxu0 0.0
      %644 = vmatmul.mubr.f32.gmra.mrb[0].mxu0 %v543
      %v645 = vpop.f32.mrb[0].mxu0
      %v646 = vadd.f32 0.0, %v645
      %v647 = vpop.f32.mrb[0].mxu0
      %648 = vmatprep.mubr.f32.mxu0 0.0
      %649 = vmatmul.mubr.f32.gmra.mrb[0].mxu0 %v544
      %v650 = vpop.f32.mrb[0].mxu0
      %v651 = vadd.f32 0.0, %v650
      %v652 = vpop.f32.mrb[0].mxu0
      %653 = vmatprep.mubr.f32.mxu0 0.0
      %654 = vmatmul.mubr.f32.gmra.mrb[0].mxu0 %v545
      %v655 = vpop.f32.mrb[0].mxu0
      %v656 = vadd.f32 0.0, %v655
      %v657 = vpop.f32.mrb[0].mxu0
      %658 = vmatprep.mubr.f32.mxu0 0.0
      %659 = vmatmul.mubr.f32.gmra.mrb[0].mxu0 %v546
      %v660 = vpop.f32.mrb[0].mxu0
      %v661 = vadd.f32 0.0, %v660
      %v662 = vpop.f32.mrb[0].mxu0
      %663 = vmatprep.mubr.f32.mxu0 0.0
      %664 = vmatmul.mubr.f32.gmra.mrb[0].mxu0 %v547
      %v665 = vpop.f32.mrb[0].mxu0
      %v666 = vadd.f32 0.0, %v665
      %v667 = vpop.f32.mrb[0].mxu0
      %668 = vmatprep.mubr.f32.mxu0 0.0
      %669 = vmatmul.mubr.f32.gmra.mrb[0].mxu0 %v548
      %v670 = vpop.f32.mrb[0].mxu0
      %v671 = vadd.f32 0.0, %v670
      %v672 = vpop.f32.mrb[0].mxu0
      %673 = vmatprep.mubr.f32.mxu0 0.0
      %674 = vmatmul.mubr.f32.gmra.mrb[0].mxu0 %v549
      %v675 = vpop.f32.mrb[0].mxu0
      %v676 = vadd.f32 0.0, %v675
      %v677 = vpop.f32.mrb[0].mxu0
      %678 = vmatprep.mubr.f32.mxu0 0.0
      %679 = vmatmul.mubr.f32.gmra.mrb[0].mxu0 %v550
      %v680 = vpop.f32.mrb[0].mxu0
      %v681 = vadd.f32 0.0, %v680
      %v682 = vpop.f32.mrb[0].mxu0
      %683 = vmatprep.mubr.f32.mxu0 0.0
      %684 = vmatmul.mubr.f32.gmra.mrb[0].mxu0 %v551
      %v685 = vpop.f32.mrb[0].mxu0
      %v686 = vadd.f32 0.0, %v685
      %v687 = vpop.f32.mrb[0].mxu0
      %688 = vmatprep.mubr.f32.mxu0 0.0
      %689 = vmatmul.mubr.f32.gmra.mrb[0].mxu0 %v552
      %v690 = vpop.f32.mrb[0].mxu0
      %v691 = vadd.f32 0.0, %v690
      %v692 = vpop.f32.mrb[0].mxu0
      %693 = vmatprep.mubr.f32.mxu0 0.0
      %694 = vmatmul.mubr.f32.gmra.mrb[0].mxu0 %v553
      %v695 = vpop.f32.mrb[0].mxu0
      %v696 = vadd.f32 0.0, %v695
      %v697 = vpop.f32.mrb[0].mxu0
      %698 = vdwg.mxu0
      %v699 = vadd.f32 %v522, %v621
      %v700 = vadd.f32 %v523, %v626
      %v701 = vadd.f32 %v524, %v631
      %v702 = vadd.f32 %v525, %v636
      %v703 = vadd.f32 %v526, %v641
      %v704 = vadd.f32 %v527, %v646
      %v705 = vadd.f32 %v528, %v651
      %v706 = vadd.f32 %v529, %v656
      %v707 = vadd.f32 %v530, %v661
      %v708 = vadd.f32 %v531, %v666
      %v709 = vadd.f32 %v532, %v671
      %v710 = vadd.f32 %v533, %v676
      %v711 = vadd.f32 %v534, %v681
      %v712 = vadd.f32 %v535, %v686
      %v713 = vadd.f32 %v536, %v691
      %v714 = vadd.f32 %v537, %v696
      %715 = vst [vmem:[#allocation2] sm:$0xff] %v699
      %716 = vst [vmem:[#allocation2 + $0x8] sm:$0xff] %v700
      %717 = vst [vmem:[#allocation2 + $0x10] sm:$0xff] %v701
      %718 = vst [vmem:[#allocation2 + $0x18] sm:$0xff] %v702
      %719 = vst [vmem:[#allocation2 + $0x20] sm:$0xff] %v703
      %720 = vst [vmem:[#allocation2 + $0x28] sm:$0xff] %v704
      %721 = vst [vmem:[#allocation2 + $0x30] sm:$0xff] %v705
      %722 = vst [vmem:[#allocation2 + $0x38] sm:$0xff] %v706
      %723 = vst [vmem:[#allocation2 + $0x40] sm:$0xff] %v707
      %724 = vst [vmem:[#allocation2 + $0x48] sm:$0xff] %v708
      %725 = vst [vmem:[#allocation2 + $0x50] sm:$0xff] %v709
      %726 = vst [vmem:[#allocation2 + $0x58] sm:$0xff] %v710
      %727 = vst [vmem:[#allocation2 + $0x60] sm:$0xff] %v711
      %728 = vst [vmem:[#allocation2 + $0x68] sm:$0xff] %v712
      %729 = vst [vmem:[#allocation2 + $0x70] sm:$0xff] %v713
      %730 = vst [vmem:[#allocation2 + $0x78] sm:$0xff] %v714
      // Predicated region
      $region41: #{graph_convolution.1} parent=35 // pred_check
        %p731 = pneg %p291
      $region42: #{graph_convolution.1} parent=35 // pred_check_branch
        %733 = sbr.rel (%p731) target = $region44
      $region43: #{graph_convolution.1} parent=35 // pred_region
        %v734 = vld [vmem:[#allocation2] sm:$0xff]
        %v735 = vld [vmem:[#allocation2 + $0x8] sm:$0xff]
        %v736 = vld [vmem:[#allocation2 + $0x10] sm:$0xff]
        %v737 = vld [vmem:[#allocation2 + $0x18] sm:$0xff]
        %v738 = vld [vmem:[#allocation2 + $0x20] sm:$0xff]
        %v739 = vld [vmem:[#allocation2 + $0x28] sm:$0xff]
        %v740 = vld [vmem:[#allocation2 + $0x30] sm:$0xff]
        %v741 = vld [vmem:[#allocation2 + $0x38] sm:$0xff]
        %v742 = vld [vmem:[#allocation2 + $0x40] sm:$0xff]
        %v743 = vld [vmem:[#allocation2 + $0x48] sm:$0xff]
        %v744 = vld [vmem:[#allocation2 + $0x50] sm:$0xff]
        %v745 = vld [vmem:[#allocation2 + $0x58] sm:$0xff]
        %v746 = vld [vmem:[#allocation2 + $0x60] sm:$0xff]
        %v747 = vld [vmem:[#allocation2 + $0x68] sm:$0xff]
        %v748 = vld [vmem:[#allocation2 + $0x70] sm:$0xff]
        %v749 = vld [vmem:[#allocation2 + $0x78] sm:$0xff]
        %v750 = vld [vmem:[%s3] sm:$0x1]
        %v752 = vlaneseq
        %v753 = vshrl.u32 %v752, 7
        %v754 = vsub.s32 0, %v753
        %v755 = vrot.slane %v750, %v754
        %v757 = vadd.f32 %v734, %v755
        %v758 = vadd.f32 %v735, %v755
        %v759 = vadd.f32 %v736, %v755
        %v760 = vadd.f32 %v737, %v755
        %v761 = vadd.f32 %v738, %v755
        %v762 = vadd.f32 %v739, %v755
        %v763 = vadd.f32 %v740, %v755
        %v764 = vadd.f32 %v741, %v755
        %v765 = vadd.f32 %v742, %v755
        %v766 = vadd.f32 %v743, %v755
        %v767 = vadd.f32 %v744, %v755
        %v768 = vadd.f32 %v745, %v755
        %v769 = vadd.f32 %v746, %v755
        %v770 = vadd.f32 %v747, %v755
        %v771 = vadd.f32 %v748, %v755
        %v772 = vadd.f32 %v749, %v755
        %773 = vst [vmem:[%s289] sm:$0xff] %v757
        %774 = vst [vmem:[%s289 + $0x8] sm:$0xff] %v758
        %775 = vst [vmem:[%s289 + $0x10] sm:$0xff] %v759
        %776 = vst [vmem:[%s289 + $0x18] sm:$0xff] %v760
        %777 = vst [vmem:[%s289 + $0x20] sm:$0xff] %v761
        %778 = vst [vmem:[%s289 + $0x28] sm:$0xff] %v762
        %779 = vst [vmem:[%s289 + $0x30] sm:$0xff] %v763
        %780 = vst [vmem:[%s289 + $0x38] sm:$0xff] %v764
        %781 = vst [vmem:[%s289 + $0x40] sm:$0xff] %v765
        %782 = vst [vmem:[%s289 + $0x48] sm:$0xff] %v766
        %783 = vst [vmem:[%s289 + $0x50] sm:$0xff] %v767
        %784 = vst [vmem:[%s289 + $0x58] sm:$0xff] %v768
        %785 = vst [vmem:[%s289 + $0x60] sm:$0xff] %v769
        %786 = vst [vmem:[%s289 + $0x68] sm:$0xff] %v770
        %787 = vst [vmem:[%s289 + $0x70] sm:$0xff] %v771
        %788 = vst [vmem:[%s289 + $0x78] sm:$0xff] %v772
      $region44: #{graph_convolution.1} parent=35 // pred_fallthru
        _
      %s789 = smul.u32 16, %s21
      %p790 = scmp.lt.s32.totalorder %s20, 1
      %s791 = scalar_select %p790, %s20, 1
      %p792 = scmp.lt.s32.totalorder %s789, 15
      %s793 = scalar_select %p792, %s789, 15
      %s794 = smul.addr %s791, 16
      %s795 = sadd.s32 %s793, %s794
      %s796 = smul.addr %s795, 8
      %s797 = scalar_lea.vmem %s4, %s796
      // Predicated region
      $region45: #{graph_convolution.1} parent=35 // pred_check
        %p798 = pneg %p154
      $region46: #{graph_convolution.1} parent=35 // pred_check_branch
        %800 = sbr.rel (%p798) target = $region48
      $region47: #{graph_convolution.1} parent=35 // pred_region
        %s801 = smul.u32 16, %s21
      $region48: #{graph_convolution.1} parent=35 // pred_fallthru
        _
    $region36: #{graph_convolution.1} parent=5 // pred_fallthru
      _
    %p802 = scmp.le.s32.totalorder 2, %s10
    // Predicated region
    $region49: #{graph_convolution.1} parent=5 // pred_check
      %p803 = pneg %p802
    $region50: #{graph_convolution.1} parent=5 // pred_check_branch
      %805 = sbr.rel (%p803) target = $region52
    $region51: #{graph_convolution.1} parent=5 // pred_region
      %s806 = ssub.s32 %s10, 2
      // Predicated region
      $region53: #{graph_convolution.1} parent=51 // pred_check
        %p807 = pneg %p160
      $region54: #{graph_convolution.1} parent=51 // pred_check_branch
        %809 = sbr.rel (%p807) target = $region56
      $region55: #{graph_convolution.1} parent=51 // pred_region
        %s810 = smul.u32 16, %s24
        %p811 = scmp.lt.s32.totalorder %s23, 1
        %s812 = scalar_select %p811, %s23, 1
        %p813 = scmp.lt.s32.totalorder %s810, 15
        %s814 = scalar_select %p813, %s810, 15
        %s815 = smul.addr %s812, 16
        %s816 = sadd.s32 %s814, %s815
        %s817 = smul.addr %s816, 8
        %s818 = scalar_lea.vmem %s4, %s817
      $region56: #{graph_convolution.1} parent=51 // pred_fallthru
        _
    $region52: #{graph_convolution.1} parent=5 // pred_fallthru
      _
  $region6: #{graph_convolution.1} parent=0 // loop_footer
    %s14 = sadd.s32 1, %s10
  $region7: #{graph_convolution.1} parent=0 // loop_footer_branch
    %9 = sbr.rel target = $region3
  $region8: #{graph_convolution.1} parent=0 // loop_exit
    _

</llo_original>
